<compile_context>
chip_gen: v5e
topology: v5e:2x2
jax: 0.10.0
libtpu: 0.0.40
codegen_flags: <defaults>
</compile_context>

<pallas_src>
import numpy as np
import jax
import jax.numpy as jnp
from jax.experimental import pallas as pl
from jax.experimental.pallas import tpu as pltpu


def _lovasz_hinge_kernel(err_ref, gt_ref, u_ref, out_ref):
    """Per-image Lovasz hinge for a (TB, P) block of images.

    err_ref: (TB, P) f32  errors sorted descending (padding lanes = -1e30)
    gt_ref : (TB, P) f32  labels permuted by the same sort (padding lanes = 0)
    u_ref  : (P, P)  bf16 upper-triangular ones (VMEM-resident across grid)
    out_ref: (TB, 128) f32 per-image loss broadcast across lanes (lane-dense)
    """
    err = err_ref[...]                       # (TB, P) f32
    gt = gt_ref[...]                         # (TB, P) f32
    TB, P = err.shape

    # Inclusive cumsum along P on the MXU: cumsum(gt)[j] = (gt @ U)[j].
    # bf16 operands (0/1 exact) with f32 accumulation -> exact result.
    cum_gt = jnp.dot(gt.astype(jnp.bfloat16), u_ref[...],
                     preferred_element_type=jnp.float32)          # (TB, P)

    idx = jax.lax.broadcasted_iota(jnp.int32, (TB, P), 1)         # j = 0..P-1
    pos = (idx + 1).astype(jnp.float32)                           # j + 1
    gts = jnp.sum(gt, axis=-1, keepdims=True)                     # (TB, 1)

    # jaccard[j] = 1 - (gts - cum_gt[j]) / (gts + cumsum(1-gt)[j])
    # with cumsum(1-gt)[j] = (j+1) - cum_gt[j]  (single-matmul trick).
    inter = gts - cum_gt
    union = gts + pos - cum_gt
    jac = 1.0 - inter / union

    # jaccard[j-1] via exclusive cumsum: cum_gt[j-1] = cum_gt[j] - gt[j].
    # For j == 0 the gradient is jaccard[0], i.e. jac_prev = 0 (masked below).
    cum_prev = cum_gt - gt
    inter_p = gts - cum_prev
    union_p = gts + (pos - 1.0) - cum_prev
    jac_prev = jnp.where(idx == 0, 0.0, 1.0 - inter_p / union_p)

    grad = jac - jac_prev
    loss = jnp.sum(jnp.maximum(err, 0.0) * grad, axis=-1, keepdims=True)  # (TB,1)

    # Lane-dense store (avoids masked vst on a narrow block).
    out_ref[...] = jnp.broadcast_to(loss, out_ref.shape)


def lovasz_hinge_pallas(logits, labels, per_image=True):
    """Binary Lovasz hinge loss. logits/labels: [B, H, W]."""
    assert per_image, "only per_image=True is implemented"
    # TODO(synk): the `ignore` label filtering path (dynamic-length masking) is
    # not implemented; the reference forward uses ignore=None.
    B = logits.shape[0]
    P = int(np.prod(logits.shape[1:]))

    logits_f = logits.reshape(B, P).astype(jnp.float32)
    labels_f = labels.reshape(B, P).astype(jnp.float32)

    signs = 2.0 * labels_f - 1.0
    errors = 1.0 - logits_f * signs

    # Single key-value sort (descending by errors); labels co-sorted in one
    # pass -- replaces argsort + two take_along_axis gathers.
    # TODO(synk): sorting has no clean Pallas-TPU primitive; it stays in XLA.
    neg_sorted, gt_sorted = jax.lax.sort((-errors, labels_f),
                                         dimension=1, num_keys=1)
    errors_sorted = -neg_sorted

    TB = 8            # images per grid step (full sublane occupancy)
    LANES = 128
    B_pad = -(-B // TB) * TB
    P_pad = -(-P // LANES) * LANES
    NEG = -1.0e30     # padded pixels: relu(err)=0 -> contribute nothing

    if (B_pad, P_pad) != (B, P):
        errors_sorted = jnp.pad(errors_sorted,
                                ((0, B_pad - B), (0, P_pad - P)),
                                constant_values=NEG)
        gt_sorted = jnp.pad(gt_sorted,
                            ((0, B_pad - B), (0, P_pad - P)),
                            constant_values=0.0)

    # Upper-triangular ones matrix, built once outside the kernel, bf16 to
    # halve the MXU/DMA cost. index_map below keeps it VMEM-resident.
    row = jax.lax.broadcasted_iota(jnp.int32, (P_pad, P_pad), 0)
    col = jax.lax.broadcasted_iota(jnp.int32, (P_pad, P_pad), 1)
    U = (row <= col).astype(jnp.bfloat16)

    out = pl.pallas_call(
        _lovasz_hinge_kernel,
        out_shape=jax.ShapeDtypeStruct((B_pad, LANES), jnp.float32),
        grid_spec=pltpu.PrefetchScalarGridSpec(
            num_scalar_prefetch=0,
            grid=(B_pad // TB,),
            in_specs=[
                pl.BlockSpec((TB, P_pad), lambda i: (i, 0)),
                pl.BlockSpec((TB, P_pad), lambda i: (i, 0)),
                pl.BlockSpec((P_pad, P_pad), lambda i: (0, 0)),  # resident U
            ],
            out_specs=pl.BlockSpec((TB, LANES), lambda i: (i, 0)),
        ),
        compiler_params=pltpu.CompilerParams(
            dimension_semantics=("parallel",)),
    )(errors_sorted, gt_sorted, U)

    per_image_loss = out[:B, 0]          # drop padded images / padded lanes
    return jnp.mean(per_image_loss)      # mean over images in the wrapper


def lovasz_hinge_ref(logits, labels):
    """Pure-JAX reference mirroring the PyTorch code (per_image=True)."""
    B = logits.shape[0]
    acc = 0.0
    for b in range(B):
        log = logits[b].reshape(-1).astype(jnp.float32)
        lab = labels[b].reshape(-1).astype(jnp.float32)
        signs = 2.0 * lab - 1.0
        errors = 1.0 - log * signs
        perm = jnp.argsort(-errors)
        errors_sorted = errors[perm]
        gt_sorted = lab[perm]
        gts = gt_sorted.sum()
        inter = gts - jnp.cumsum(gt_sorted)
        union = gts + jnp.cumsum(1.0 - gt_sorted)
        jac = 1.0 - inter / union
        grad = jnp.concatenate([jac[:1], jac[1:] - jac[:-1]])
        acc = acc + jnp.sum(jnp.maximum(errors_sorted, 0.0) * grad)
    return acc / B


if __name__ == "__main__":
    key = jax.random.PRNGKey(0)
    k_log, k_lab = jax.random.split(key)

    B, H, W = 2, 16, 16
    logits = jax.random.normal(k_log, (B, H, W), dtype=jnp.float32)
    labels = jax.random.bernoulli(k_lab, 0.5, (B, H, W)).astype(jnp.float32)

    loss_fn = jax.jit(lovasz_hinge_pallas)
    loss = jax.block_until_ready(loss_fn(logits, labels))
    ref = jax.block_until_ready(lovasz_hinge_ref(logits, labels))

    assert np.isfinite(float(loss))
    np.testing.assert_allclose(float(loss), float(ref), rtol=1e-5, atol=1e-5)
    print("KERNEL_OK")
</pallas_src>

<mosaic_0001>
module attributes {stable_mosaic.version = 11 : i64} {
  func.func @_lovasz_hinge_kernel(%arg0: i32, %arg1: memref<8x256xf32, #tpu.memory_space<vmem>>, %arg2: memref<8x256xf32, #tpu.memory_space<vmem>>, %arg3: memref<256x256xbf16, #tpu.memory_space<vmem>>, %arg4: memref<8x128xf32, #tpu.memory_space<vmem>>) attributes {dimension_semantics = [#tpu.dimension_semantics<parallel>], iteration_bounds = array<i64: 1>, scalar_prefetch = 0 : i64, scratch_operands = 0 : i64, tpu.core_type = #tpu.core_type<tc>, window_params = [{transform_indices = @transform_0, window_bounds = array<i64: 8, 256>}, {transform_indices = @transform_1, window_bounds = array<i64: 8, 256>}, {pipeline_mode = #tpu.pipeline_mode<synchronous>, transform_indices = @transform_2, window_bounds = array<i64: 256, 256>}, {transform_indices = @transform_3, window_bounds = array<i64: 8, 128>}]} {
    %c0 = arith.constant 0 : index
    %c0_0 = arith.constant 0 : index
    %0 = vector.load %arg1[%c0, %c0_0] : memref<8x256xf32, #tpu.memory_space<vmem>>, vector<8x256xf32>
    %c0_1 = arith.constant 0 : index
    %c0_2 = arith.constant 0 : index
    %1 = vector.load %arg2[%c0_1, %c0_2] : memref<8x256xf32, #tpu.memory_space<vmem>>, vector<8x256xf32>
    %2 = arith.truncf %1 : vector<8x256xf32> to vector<8x256xbf16>
    %c0_3 = arith.constant 0 : index
    %c0_4 = arith.constant 0 : index
    %3 = vector.load %arg3[%c0_3, %c0_4] : memref<256x256xbf16, #tpu.memory_space<vmem>>, vector<256x256xbf16>
    %cst = arith.constant dense<0.000000e+00> : vector<8x256xf32>
    %4 = tpu.matmul %2, %3, %cst {dimension_numbers = #tpu.dot_dimension_numbers<[1], [0], [0], [1], [0, 0, 1, 1], [], []>} : vector<8x256xbf16>, vector<256x256xbf16>, vector<8x256xf32> -> vector<8x256xf32>
    %5 = tpu.iota {dimensions = array<i32: 1>} : vector<8x256xi32>
    %c1_i32 = arith.constant 1 : i32
    %6 = vector.broadcast %c1_i32 : i32 to vector<8x256xi32>
    %7 = arith.addi %5, %6 : vector<8x256xi32>
    %8 = arith.sitofp %7 : vector<8x256xi32> to vector<8x256xf32>
    %cst_5 = arith.constant dense<0.000000e+00> : vector<8xf32>
    %9 = vector.multi_reduction <add>, %1, %cst_5 [1] : vector<8x256xf32> to vector<8xf32>
    %10 = vector.shape_cast %9 : vector<8xf32> to vector<8x1xf32>
    %11 = vector.broadcast %10 : vector<8x1xf32> to vector<8x256xf32>
    %12 = arith.subf %11, %4 : vector<8x256xf32>
    %13 = vector.broadcast %10 : vector<8x1xf32> to vector<8x256xf32>
    %14 = arith.addf %13, %8 : vector<8x256xf32>
    %15 = arith.subf %14, %4 : vector<8x256xf32>
    %16 = arith.divf %12, %15 : vector<8x256xf32>
    %cst_6 = arith.constant 1.000000e+00 : f32
    %17 = vector.broadcast %cst_6 : f32 to vector<8x256xf32>
    %18 = arith.subf %17, %16 : vector<8x256xf32>
    %19 = arith.subf %4, %1 : vector<8x256xf32>
    %20 = vector.broadcast %10 : vector<8x1xf32> to vector<8x256xf32>
    %21 = arith.subf %20, %19 : vector<8x256xf32>
    %cst_7 = arith.constant 1.000000e+00 : f32
    %22 = vector.broadcast %cst_7 : f32 to vector<8x256xf32>
    %23 = arith.subf %8, %22 : vector<8x256xf32>
    %24 = vector.broadcast %10 : vector<8x1xf32> to vector<8x256xf32>
    %25 = arith.addf %24, %23 : vector<8x256xf32>
    %26 = arith.subf %25, %19 : vector<8x256xf32>
    %c0_i32 = arith.constant 0 : i32
    %27 = vector.broadcast %c0_i32 : i32 to vector<8x256xi32>
    %28 = arith.cmpi eq, %5, %27 : vector<8x256xi32>
    %29 = arith.divf %21, %26 : vector<8x256xf32>
    %cst_8 = arith.constant 1.000000e+00 : f32
    %30 = vector.broadcast %cst_8 : f32 to vector<8x256xf32>
    %31 = arith.subf %30, %29 : vector<8x256xf32>
    %cst_9 = arith.constant 0.000000e+00 : f32
    %32 = vector.broadcast %cst_9 : f32 to vector<8x256xf32>
    %33 = arith.select %28, %32, %31 : vector<8x256xi1>, vector<8x256xf32>
    %34 = arith.subf %18, %33 : vector<8x256xf32>
    %cst_10 = arith.constant 0.000000e+00 : f32
    %35 = vector.broadcast %cst_10 : f32 to vector<8x256xf32>
    %36 = arith.maximumf %0, %35 : vector<8x256xf32>
    %37 = arith.mulf %36, %34 : vector<8x256xf32>
    %cst_11 = arith.constant dense<0.000000e+00> : vector<8xf32>
    %38 = vector.multi_reduction <add>, %37, %cst_11 [1] : vector<8x256xf32> to vector<8xf32>
    %39 = vector.shape_cast %38 : vector<8xf32> to vector<8x1xf32>
    %40 = vector.shape_cast %39 : vector<8x1xf32> to vector<8x1xf32>
    %41 = vector.broadcast %40 : vector<8x1xf32> to vector<8x128xf32>
    %c0_12 = arith.constant 0 : index
    %c0_13 = arith.constant 0 : index
    %42 = vector.load %arg4[%c0_12, %c0_13] : memref<8x128xf32, #tpu.memory_space<vmem>>, vector<8x128xf32>
    tpu.vector_store %arg4[%c0_12, %c0_13], %41 {strides = array<i32>} : memref<8x128xf32, #tpu.memory_space<vmem>>, vector<8x128xf32>,
    return
  }
  func.func @transform_0(%arg0: i32) -> (i32, i32) {
    %c0_i32 = arith.constant 0 : i32
    %c0_i32_0 = arith.constant 0 : i32
    return %arg0, %c0_i32 : i32, i32
  }
  func.func @transform_1(%arg0: i32) -> (i32, i32) {
    %c0_i32 = arith.constant 0 : i32
    %c0_i32_0 = arith.constant 0 : i32
    return %arg0, %c0_i32 : i32, i32
  }
  func.func @transform_2(%arg0: i32) -> (i32, i32) {
    %c0_i32 = arith.constant 0 : i32
    %c0_i32_0 = arith.constant 0 : i32
    %c0_i32_1 = arith.constant 0 : i32
    return %c0_i32, %c0_i32_0 : i32, i32
  }
  func.func @transform_3(%arg0: i32) -> (i32, i32) {
    %c0_i32 = arith.constant 0 : i32
    %c0_i32_0 = arith.constant 0 : i32
    return %arg0, %c0_i32 : i32, i32
  }
}

</mosaic_0001>

<llo_original>
// kernel: neg.3
$region0: #{neg.3}
  #allocation0 [shape = 's32[1]{0}', space=sflag, size = 0x4, scoped, tag = 'scoped memory for neg.3']
  %s0 = inlined_call_operand.vmem [shape: f32[2,256], index: 0, kind: input, shape index: {}]
  %s1 = inlined_call_operand.vmem [shape: f32[2,256], index: 1, kind: output, shape index: {}]
  %v2 = vld [vmem:[%s0] sm:$0x3]
  %3 = xla_tuple %v2
  %4 = xla_tuple %3
  %v5 = vxor.u32 %v2, 2147483648
  %6 = xla_tuple %v5
  %7 = vst [vmem:[%s1] sm:$0x3] %v5
  %s8 = scalar_lea.vmem %s0, 2
  %v9 = vld [vmem:[%s8] sm:$0x3]
  %10 = xla_tuple %v9
  %11 = xla_tuple %10
  %v12 = vxor.u32 %v9, 2147483648
  %13 = xla_tuple %v12
  %s14 = scalar_lea.vmem %s1, 2
  %15 = vst [vmem:[%s14] sm:$0x3] %v12

// kernel: lovasz_hinge_pallas.1
$region0: #{lovasz_hinge_pallas.1}
  #allocation0 [shape = 'u32[]', space=smem, size = 0x4, offset = 0x4, fixed_abs, tag = 'smem constant byte address 0x4 - core index']
  #allocation1 [shape = 'u32[72,128]{1,0:T(1,128)}', space=vmem, size = 0x9000, scoped, tag = 'internal scratch']
  %s0 = inlined_call_operand.vmem [shape: f32[8,256], index: 0, kind: input, shape index: {}]
  %s1 = inlined_call_operand.vmem [shape: f32[8,256], index: 1, kind: input, shape index: {}]
  %s2 = inlined_call_operand.vmem [shape: bf16[256,256], index: 2, kind: input, shape index: {}]
  %s3 = inlined_call_operand.vmem [shape: f32[8,128], index: 3, kind: output, shape index: {}]
  %s4 = sld [smem:[#allocation0]]
  $region22: #{lovasz_hinge_pallas.1} parent=0
    _
  %s6 = ssub.s32 1, %s4
  %s7 = scalar_select 0, %s6, %s4
  // Predicated region
  $region2: #{lovasz_hinge_pallas.1} parent=0 // pred_check
    _
  $region3: #{lovasz_hinge_pallas.1} parent=0 // pred_check_branch
    %9 = sbr.rel (0) target = $region5
  $region4: #{lovasz_hinge_pallas.1} parent=0 // pred_region
    _
  $region5: #{lovasz_hinge_pallas.1} parent=0 // pred_fallthru
    _
  // Predicated region
  $region6: #{lovasz_hinge_pallas.1} parent=0 // pred_check
    _
  $region7: #{lovasz_hinge_pallas.1} parent=0 // pred_check_branch
    %11 = sbr.rel (0) target = $region9
  $region8: #{lovasz_hinge_pallas.1} parent=0 // pred_region
    _
  $region9: #{lovasz_hinge_pallas.1} parent=0 // pred_fallthru
    _
  // Predicated region
  $region10: #{lovasz_hinge_pallas.1} parent=0 // pred_check
    _
  $region11: #{lovasz_hinge_pallas.1} parent=0 // pred_check_branch
    %13 = sbr.rel (0) target = $region13
  $region12: #{lovasz_hinge_pallas.1} parent=0 // pred_region
    _
  $region13: #{lovasz_hinge_pallas.1} parent=0 // pred_fallthru
    _
  %v14 = vld [vmem:[%s0] sm:$0xff]
  %v15 = vld [vmem:[%s0 + $0x8] sm:$0xff]
  %v16 = vld [vmem:[%s1] sm:$0xff]
  %v17 = vld [vmem:[%s1 + $0x8] sm:$0xff]
  %v18 = vpack.c.bf16 %v16, %v16
  %v19 = vpack.c.bf16 %v17, %v17
  %v20 = vld [vmem:[%s2] sm:$0xff]
  %v21 = vld [vmem:[%s2 + $0x8] sm:$0xff]
  %v22 = vld [vmem:[%s2 + $0x10] sm:$0xff]
  %v23 = vld [vmem:[%s2 + $0x18] sm:$0xff]
  %v24 = vld [vmem:[%s2 + $0x20] sm:$0xff]
  %v25 = vld [vmem:[%s2 + $0x28] sm:$0xff]
  %v26 = vld [vmem:[%s2 + $0x30] sm:$0xff]
  %v27 = vld [vmem:[%s2 + $0x38] sm:$0xff]
  %v28 = vld [vmem:[%s2 + $0x40] sm:$0xff]
  %v29 = vld [vmem:[%s2 + $0x48] sm:$0xff]
  %v30 = vld [vmem:[%s2 + $0x50] sm:$0xff]
  %v31 = vld [vmem:[%s2 + $0x58] sm:$0xff]
  %v32 = vld [vmem:[%s2 + $0x60] sm:$0xff]
  %v33 = vld [vmem:[%s2 + $0x68] sm:$0xff]
  %v34 = vld [vmem:[%s2 + $0x70] sm:$0xff]
  %v35 = vld [vmem:[%s2 + $0x78] sm:$0xff]
  %v36 = vld [vmem:[%s2 + $0x80] sm:$0xff]
  %v37 = vld [vmem:[%s2 + $0x88] sm:$0xff]
  %v38 = vld [vmem:[%s2 + $0x90] sm:$0xff]
  %v39 = vld [vmem:[%s2 + $0x98] sm:$0xff]
  %v40 = vld [vmem:[%s2 + $0xa0] sm:$0xff]
  %v41 = vld [vmem:[%s2 + $0xa8] sm:$0xff]
  %v42 = vld [vmem:[%s2 + $0xb0] sm:$0xff]
  %v43 = vld [vmem:[%s2 + $0xb8] sm:$0xff]
  %v44 = vld [vmem:[%s2 + $0xc0] sm:$0xff]
  %v45 = vld [vmem:[%s2 + $0xc8] sm:$0xff]
  %v46 = vld [vmem:[%s2 + $0xd0] sm:$0xff]
  %v47 = vld [vmem:[%s2 + $0xd8] sm:$0xff]
  %v48 = vld [vmem:[%s2 + $0xe0] sm:$0xff]
  %v49 = vld [vmem:[%s2 + $0xe8] sm:$0xff]
  %v50 = vld [vmem:[%s2 + $0xf0] sm:$0xff]
  %v51 = vld [vmem:[%s2 + $0xf8] sm:$0xff]
  %v84 = vunpack.c.l.b16 %v20
  %v85 = vunpack.c.h.b16 %v20
  %v86 = vunpack.c.l.b16 %v21
  %v87 = vunpack.c.h.b16 %v21
  %v88 = vunpack.c.l.b16 %v22
  %v89 = vunpack.c.h.b16 %v22
  %v90 = vunpack.c.l.b16 %v23
  %v91 = vunpack.c.h.b16 %v23
  %v92 = vunpack.c.l.b16 %v24
  %v93 = vunpack.c.h.b16 %v24
  %v94 = vunpack.c.l.b16 %v25
  %v95 = vunpack.c.h.b16 %v25
  %v96 = vunpack.c.l.b16 %v26
  %v97 = vunpack.c.h.b16 %v26
  %v98 = vunpack.c.l.b16 %v27
  %v99 = vunpack.c.h.b16 %v27
  %v100 = vunpack.c.l.b16 %v28
  %v101 = vunpack.c.h.b16 %v28
  %v102 = vunpack.c.l.b16 %v29
  %v103 = vunpack.c.h.b16 %v29
  %v104 = vunpack.c.l.b16 %v30
  %v105 = vunpack.c.h.b16 %v30
  %v106 = vunpack.c.l.b16 %v31
  %v107 = vunpack.c.h.b16 %v31
  %v108 = vunpack.c.l.b16 %v32
  %v109 = vunpack.c.h.b16 %v32
  %v110 = vunpack.c.l.b16 %v33
  %v111 = vunpack.c.h.b16 %v33
  %v112 = vunpack.c.l.b16 %v34
  %v113 = vunpack.c.h.b16 %v34
  %v114 = vunpack.c.l.b16 %v35
  %v115 = vunpack.c.h.b16 %v35
  %v116 = vunpack.c.l.b16 %v36
  %v117 = vunpack.c.h.b16 %v36
  %v118 = vunpack.c.l.b16 %v37
  %v119 = vunpack.c.h.b16 %v37
  %v120 = vunpack.c.l.b16 %v38
  %v121 = vunpack.c.h.b16 %v38
  %v122 = vunpack.c.l.b16 %v39
  %v123 = vunpack.c.h.b16 %v39
  %v124 = vunpack.c.l.b16 %v40
  %v125 = vunpack.c.h.b16 %v40
  %v126 = vunpack.c.l.b16 %v41
  %v127 = vunpack.c.h.b16 %v41
  %v128 = vunpack.c.l.b16 %v42
  %v129 = vunpack.c.h.b16 %v42
  %v130 = vunpack.c.l.b16 %v43
  %v131 = vunpack.c.h.b16 %v43
  %v132 = vunpack.c.l.b16 %v44
  %v133 = vunpack.c.h.b16 %v44
  %v134 = vunpack.c.l.b16 %v45
  %v135 = vunpack.c.h.b16 %v45
  %v136 = vunpack.c.l.b16 %v46
  %v137 = vunpack.c.h.b16 %v46
  %v138 = vunpack.c.l.b16 %v47
  %v139 = vunpack.c.h.b16 %v47
  %v140 = vunpack.c.l.b16 %v48
  %v141 = vunpack.c.h.b16 %v48
  %v142 = vunpack.c.l.b16 %v49
  %v143 = vunpack.c.h.b16 %v49
  %v144 = vunpack.c.l.b16 %v50
  %v145 = vunpack.c.h.b16 %v50
  %v146 = vunpack.c.l.b16 %v51
  %v147 = vunpack.c.h.b16 %v51
  %v148 = vpack.c.b16 %v86, %v84
  %v149 = vpack.c.b16 %v87, %v85
  %v150 = vpack.c.b16 %v90, %v88
  %v151 = vpack.c.b16 %v91, %v89
  %v152 = vpack.c.b16 %v94, %v92
  %v153 = vpack.c.b16 %v95, %v93
  %v154 = vpack.c.b16 %v98, %v96
  %v155 = vpack.c.b16 %v99, %v97
  %v156 = vpack.c.b16 %v102, %v100
  %v157 = vpack.c.b16 %v103, %v101
  %v158 = vpack.c.b16 %v106, %v104
  %v159 = vpack.c.b16 %v107, %v105
  %v160 = vpack.c.b16 %v110, %v108
  %v161 = vpack.c.b16 %v111, %v109
  %v162 = vpack.c.b16 %v114, %v112
  %v163 = vpack.c.b16 %v115, %v113
  %v164 = vpack.c.b16 %v118, %v116
  %v165 = vpack.c.b16 %v119, %v117
  %v166 = vpack.c.b16 %v122, %v120
  %v167 = vpack.c.b16 %v123, %v121
  %v168 = vpack.c.b16 %v126, %v124
  %v169 = vpack.c.b16 %v127, %v125
  %v170 = vpack.c.b16 %v130, %v128
  %v171 = vpack.c.b16 %v131, %v129
  %v172 = vpack.c.b16 %v134, %v132
  %v173 = vpack.c.b16 %v135, %v133
  %v174 = vpack.c.b16 %v138, %v136
  %v175 = vpack.c.b16 %v139, %v137
  %v176 = vpack.c.b16 %v142, %v140
  %v177 = vpack.c.b16 %v143, %v141
  %v178 = vpack.c.b16 %v146, %v144
  %v179 = vpack.c.b16 %v147, %v145
  %212 = vmatpush.bf16.msra.mxu0 %v162
  %213 = vmatpush.bf16.msra.mxu0 %v160
  %214 = vmatpush.bf16.msra.mxu0 %v158
  %215 = vmatpush.bf16.msra.mxu0 %v156
  %216 = vmatpush.bf16.msra.mxu0 %v154
  %217 = vmatpush.bf16.msra.mxu0 %v152
  %218 = vmatpush.bf16.msra.mxu0 %v150
  %219 = vmatpush.bf16.msra.mxu0 %v148
  %220 = vmatmul.bf16.gmra.mxu0 %v18
  %v221 = vpop.f32.mrf.mxu0
  %v222 = vadd.f32 0.0, %v221
  %v223 = vpop.f32.mrf.mxu0
  %224 = vdwg.mxu0
  %225 = vmatpush.bf16.msra.mxu0 %v178
  %226 = vmatpush.bf16.msra.mxu0 %v176
  %227 = vmatpush.bf16.msra.mxu0 %v174
  %228 = vmatpush.bf16.msra.mxu0 %v172
  %229 = vmatpush.bf16.msra.mxu0 %v170
  %230 = vmatpush.bf16.msra.mxu0 %v168
  %231 = vmatpush.bf16.msra.mxu0 %v166
  %232 = vmatpush.bf16.msra.mxu0 %v164
  %233 = vmatmul.bf16.gmra.mxu0 %v19
  %v234 = vpop.f32.mrf.mxu0
  %v235 = vadd.f32 %v222, %v234
  %v236 = vpop.f32.mrf.mxu0
  %237 = vdwg.mxu0
  %238 = vmatpush.bf16.msra.mxu0 %v163
  %239 = vmatpush.bf16.msra.mxu0 %v161
  %240 = vmatpush.bf16.msra.mxu0 %v159
  %241 = vmatpush.bf16.msra.mxu0 %v157
  %242 = vmatpush.bf16.msra.mxu0 %v155
  %243 = vmatpush.bf16.msra.mxu0 %v153
  %244 = vmatpush.bf16.msra.mxu0 %v151
  %245 = vmatpush.bf16.msra.mxu0 %v149
  %246 = vmatmul.bf16.gmra.mxu0 %v18
  %v247 = vpop.f32.mrf.mxu0
  %v248 = vadd.f32 0.0, %v247
  %v249 = vpop.f32.mrf.mxu0
  %250 = vdwg.mxu0
  %251 = vmatpush.bf16.msra.mxu0 %v179
  %252 = vmatpush.bf16.msra.mxu0 %v177
  %253 = vmatpush.bf16.msra.mxu0 %v175
  %254 = vmatpush.bf16.msra.mxu0 %v173
  %255 = vmatpush.bf16.msra.mxu0 %v171
  %256 = vmatpush.bf16.msra.mxu0 %v169
  %257 = vmatpush.bf16.msra.mxu0 %v167
  %258 = vmatpush.bf16.msra.mxu0 %v165
  %259 = vmatmul.bf16.gmra.mxu0 %v19
  %v260 = vpop.f32.mrf.mxu0
  %v261 = vadd.f32 %v248, %v260
  %v262 = vpop.f32.mrf.mxu0
  %263 = vdwg.mxu0
  %v264 = vlaneseq
  %v265 = vand.u32 %v264, 127
  %v266 = vadd.s32 %v265, 128
  %v267 = vadd.s32 %v265, 1
  %v268 = vadd.s32 %v266, 1
  %v269 = vcvt.s32.f32 %v267
  %v270 = vcvt.s32.f32 %v268
  %v271 = vadd.f32 %v16, %v17
  %272 = vadd.xlane.f32.xlu0 %v271
  %v273 = vpop.xlane.xlu0 %272
  %v274 = vsub.f32 %v273, %v235
  %v275 = vsub.f32 %v273, %v261
  %v276 = vadd.f32 %v273, %v269
  %v277 = vadd.f32 %v273, %v270
  %v278 = vsub.f32 %v276, %v235
  %v279 = vsub.f32 %v277, %v261
  %v280 = vrcp.pop %v278
  %v281 = vmul.f32 %v278, %v280
  %v282 = vsub.f32 1.0, %v281
  %v283 = vmul.f32 %v280, %v282
  %v284 = vadd.f32 %v280, %v283
  %vm285 = vweird.f32 %v278
  %vm286 = vweird.f32 %v280
  %vm287 = vmor %vm285, %vm286
  %v288 = vsel %vm287, %v280, %v284
  %v289 = vand.u32 2147483647, %v278
  %vm290 = vcmp.eq.f32.partialorder %v289, 8.507059e+37
  %v291 = vand.u32 %v278, 2147483648
  %v292 = vor.u32 1.1754944e-38, %v291
  %v293 = vsel %vm290, %v292, %v288
  %v294 = vmul.f32 %v274, %v293
  %v295 = vrcp.pop %v279
  %v296 = vmul.f32 %v279, %v295
  %v297 = vsub.f32 1.0, %v296
  %v298 = vmul.f32 %v295, %v297
  %v299 = vadd.f32 %v295, %v298
  %vm300 = vweird.f32 %v279
  %vm301 = vweird.f32 %v295
  %vm302 = vmor %vm300, %vm301
  %v303 = vsel %vm302, %v295, %v299
  %v304 = vand.u32 2147483647, %v279
  %vm305 = vcmp.eq.f32.partialorder %v304, 8.507059e+37
  %v306 = vand.u32 %v279, 2147483648
  %v307 = vor.u32 1.1754944e-38, %v306
  %v308 = vsel %vm305, %v307, %v303
  %v309 = vmul.f32 %v275, %v308
  %v310 = vsub.f32 1.0, %v294
  %v311 = vsub.f32 1.0, %v309
  %v312 = vsub.f32 %v235, %v16
  %v313 = vsub.f32 %v261, %v17
  %v314 = vsub.f32 %v273, %v312
  %v315 = vsub.f32 %v273, %v313
  %v316 = vsub.f32 %v269, 1.0
  %v317 = vsub.f32 %v270, 1.0
  %v318 = vadd.f32 %v273, %v316
  %v319 = vadd.f32 %v273, %v317
  %v320 = vsub.f32 %v318, %v312
  %v321 = vsub.f32 %v319, %v313
  %vm322 = vcmp.eq.s32.totalorder %v265, 0
  %vm323 = vcmp.eq.s32.totalorder %v266, 0
  %v324 = vrcp.pop %v320
  %v325 = vmul.f32 %v320, %v324
  %v326 = vsub.f32 1.0, %v325
  %v327 = vmul.f32 %v324, %v326
  %v328 = vadd.f32 %v324, %v327
  %vm329 = vweird.f32 %v320
  %vm330 = vweird.f32 %v324
  %vm331 = vmor %vm329, %vm330
  %v332 = vsel %vm331, %v324, %v328
  %v333 = vand.u32 2147483647, %v320
  %vm334 = vcmp.eq.f32.partialorder %v333, 8.507059e+37
  %v335 = vand.u32 %v320, 2147483648
  %v336 = vor.u32 1.1754944e-38, %v335
  %v337 = vsel %vm334, %v336, %v332
  %v338 = vmul.f32 %v314, %v337
  %v339 = vrcp.pop %v321
  %v340 = vmul.f32 %v321, %v339
  %v341 = vsub.f32 1.0, %v340
  %v342 = vmul.f32 %v339, %v341
  %v343 = vadd.f32 %v339, %v342
  %vm344 = vweird.f32 %v321
  %vm345 = vweird.f32 %v339
  %vm346 = vmor %vm344, %vm345
  %v347 = vsel %vm346, %v339, %v343
  %v348 = vand.u32 2147483647, %v321
  %vm349 = vcmp.eq.f32.partialorder %v348, 8.507059e+37
  %v350 = vand.u32 %v321, 2147483648
  %v351 = vor.u32 1.1754944e-38, %v350
  %v352 = vsel %vm349, %v351, %v347
  %v353 = vmul.f32 %v315, %v352
  %v354 = vsub.f32 1.0, %v338
  %v355 = vsub.f32 1.0, %v353
  %v356 = vsel %vm322, 0.0, %v354
  %v357 = vsel %vm323, 0.0, %v355
  %v358 = vsub.f32 %v310, %v356
  %v359 = vsub.f32 %v311, %v357
  %v360 = vmax.f32 %v14, 0.0
  %v361 = vmax.f32 %v15, 0.0
  %v362 = vmul.f32 %v360, %v358
  %v363 = vmul.f32 %v361, %v359
  %v364 = vadd.f32 %v362, %v363
  %365 = vadd.xlane.f32.xlu0 %v364
  %v366 = vpop.xlane.xlu0 %365
  %367 = vst [vmem:[%s3] sm:$0xff] %v366
  // Predicated region
  $region14: #{lovasz_hinge_pallas.1} parent=0 // pred_check
    _
  $region15: #{lovasz_hinge_pallas.1} parent=0 // pred_check_branch
    %369 = sbr.rel (0) target = $region17
  $region16: #{lovasz_hinge_pallas.1} parent=0 // pred_region
    _
  $region17: #{lovasz_hinge_pallas.1} parent=0 // pred_fallthru
    _
  // Predicated region
  $region18: #{lovasz_hinge_pallas.1} parent=0 // pred_check
    _
  $region19: #{lovasz_hinge_pallas.1} parent=0 // pred_check_branch
    %371 = sbr.rel (0) target = $region21
  $region20: #{lovasz_hinge_pallas.1} parent=0 // pred_region
    _
  $region21: #{lovasz_hinge_pallas.1} parent=0 // pred_fallthru
    _

</llo_original>
